<compile_context>
chip_gen: v6e
topology: v6e:2x2x1
jax: 0.10.0
libtpu: 0.0.40
codegen_flags: <defaults>
</compile_context>

<pallas_src>
import functools

import jax
import jax.numpy as jnp
from jax.experimental import pallas as pl
from jax.experimental.pallas import tpu as pltpu


# -----------------------------------------------------------------------------
# Config (mirrors the PyTorch Config)
# -----------------------------------------------------------------------------
POINT_FEAT_DIM = 64      # Config.point_feat_dim
BN_EPS = 1e-5

IN_DIM = 4               # raw point feature dim
H1 = 64
H2 = 128
OUT_PAD = 128            # pad 64 -> 128 so the only HBM store is lane-dense
MAX_TILE_N = 2048        # point-tile cap (VMEM friendly on every generation)
MAX_ROWS_PER_STEP = 2048 # Bt * tile_n budget per grid step (~6-8 MiB VMEM)


# -----------------------------------------------------------------------------
# Fused Pallas kernel: 3-layer MLP + max-pool over points
# -----------------------------------------------------------------------------
def _pointnet_fused_kernel(x_ref, w1_ref, b1_ref, w2_ref, b2_ref,
                           w3_ref, b3_ref, o_ref, *,
                           n_total, tile_n, bt, n_tiles):
    """One (batch-tile, point-tile) grid step.

    x_ref : (bt, tile_n, 4) f32  -- point tile of bt batch elements
    w*_ref: BN-folded weights (w1 f32, w2/w3 bf16); b*_ref: (1, width) f32
    o_ref : (bt, 1, OUT_PAD) f32 -- per-batch pooled features; revisited
                                    (running max) when n_tiles > 1
    """
    rows = bt * tile_n

    x = x_ref[...].reshape(rows, IN_DIM)                                # (R, 4) f32

    # Layer 1 in f32: K=4 is negligible MXU work and keeps raw-coordinate
    # precision (bf16 would distort large world coordinates).
    h = jnp.dot(x, w1_ref[...], preferred_element_type=jnp.float32)
    h = jnp.maximum(h + b1_ref[...], 0.0).astype(jnp.bfloat16)          # (R, 64)

    h = jnp.dot(h, w2_ref[...], preferred_element_type=jnp.float32)
    h = jnp.maximum(h + b2_ref[...], 0.0).astype(jnp.bfloat16)          # (R, 128)

    h = jnp.dot(h, w3_ref[...], preferred_element_type=jnp.float32)
    h = h + b3_ref[...]                                                 # (R, 128) f32

    h = h.reshape(bt, tile_n, OUT_PAD)

    # Ragged last point-tile: only pay for the iota+select when it can matter.
    if n_total % tile_n != 0:
        nt = pl.program_id(1)
        pt_idx = jax.lax.broadcasted_iota(jnp.int32, (bt, tile_n, 1), 1) \
            + nt * tile_n
        h = jnp.where(pt_idx < n_total, h, -jnp.inf)

    pooled = jnp.max(h, axis=1, keepdims=True)                          # (bt, 1, 128)

    if n_tiles == 1:
        o_ref[...] = pooled
    else:
        nt = pl.program_id(1)

        @pl.when(nt == 0)
        def _():
            o_ref[...] = jnp.full(o_ref.shape, -jnp.inf, o_ref.dtype)

        o_ref[...] = jnp.maximum(o_ref[...], pooled)


# -----------------------------------------------------------------------------
# Parameter prep: fold eval-mode BatchNorm into the linear weights/biases
# -----------------------------------------------------------------------------
def _bn_fold(w, b, gamma, beta, mean, var):
    scale = gamma / jnp.sqrt(var + BN_EPS)
    return w * scale[None, :], (b - mean) * scale + beta


def _prep_weights(params):
    w1, b1 = _bn_fold(params["l1_w"], params["l1_b"], *params["bn1"])
    w2, b2 = _bn_fold(params["l2_w"], params["l2_b"], *params["bn2"])
    w3, b3 = params["l3_w"], params["l3_b"]

    w3 = jnp.pad(w3, ((0, 0), (0, OUT_PAD - POINT_FEAT_DIM)))           # (128, 128)
    b3 = jnp.pad(b3, (0, OUT_PAD - POINT_FEAT_DIM))                     # (128,)

    return (w1.astype(jnp.float32), b1.reshape(1, H1).astype(jnp.float32),
            w2.astype(jnp.bfloat16), b2.reshape(1, H2).astype(jnp.float32),
            w3.astype(jnp.bfloat16), b3.reshape(1, OUT_PAD).astype(jnp.float32))


# -----------------------------------------------------------------------------
# Forward pass
# -----------------------------------------------------------------------------
def pointnet_branch_forward(params, points):
    """points: (B, N, 4) f32 -> (B, POINT_FEAT_DIM) f32 (PointNetBranch.forward)."""
    B, N, C = points.shape
    assert C == IN_DIM, f"expected {IN_DIM} point features, got {C}"

    w1, b1, w2, b2, w3, b3 = _prep_weights(params)

    # --- tiling ---------------------------------------------------------
    tile_n = min(N, MAX_TILE_N)
    n_tiles = pl.cdiv(N, tile_n)

    bt = min(B, max(1, MAX_ROWS_PER_STEP // tile_n))
    if bt > 1 and tile_n % 8 != 0:
        bt = 1              # keep the in-kernel (bt, tile_n) merge sublane-aligned
    n_b_tiles = pl.cdiv(B, bt)
    b_pad = n_b_tiles * bt

    x = points.astype(jnp.float32)
    if b_pad != B:           # only in the large-B, non-divisible edge case
        x = jnp.pad(x, ((0, b_pad - B), (0, 0), (0, 0)))

    kernel = functools.partial(_pointnet_fused_kernel,
                               n_total=N, tile_n=tile_n, bt=bt, n_tiles=n_tiles)

    def resident(shape):     # full-array, VMEM-resident across all grid steps
        nd = len(shape)
        return pl.BlockSpec(shape, lambda b, n: (0,) * nd)

    out = pl.pallas_call(
        kernel,
        out_shape=jax.ShapeDtypeStruct((b_pad, 1, OUT_PAD), jnp.float32),
        grid_spec=pltpu.PrefetchScalarGridSpec(
            num_scalar_prefetch=0,
            grid=(n_b_tiles, n_tiles),
            in_specs=[
                pl.BlockSpec((bt, tile_n, IN_DIM), lambda b, n: (b, n, 0)),
                resident((IN_DIM, H1)), resident((1, H1)),
                resident((H1, H2)), resident((1, H2)),
                resident((H2, OUT_PAD)), resident((1, OUT_PAD)),
            ],
            out_specs=pl.BlockSpec((bt, 1, OUT_PAD), lambda b, n: (b, 0, 0)),
        ),
        compiler_params=pltpu.CompilerParams(
            dimension_semantics=("parallel", "arbitrary"),
            vmem_limit_bytes=64 << 20),
    )(x, w1, b1, w2, b2, w3, b3)

    return out[:B, 0, :POINT_FEAT_DIM]                                  # (B, 64)


# -----------------------------------------------------------------------------
# Pure-JAX f32 reference (for correctness check)
# -----------------------------------------------------------------------------
def pointnet_branch_reference(params, points):
    B, N, _ = points.shape
    x = points.reshape(B * N, IN_DIM).astype(jnp.float32)
    w1, b1 = _bn_fold(params["l1_w"], params["l1_b"], *params["bn1"])
    w2, b2 = _bn_fold(params["l2_w"], params["l2_b"], *params["bn2"])
    h = jnp.maximum(x @ w1 + b1, 0.0)
    h = jnp.maximum(h @ w2 + b2, 0.0)
    h = h @ params["l3_w"] + params["l3_b"]
    return jnp.max(h.reshape(B, N, POINT_FEAT_DIM), axis=1)


# -----------------------------------------------------------------------------
# Deterministic synthetic parameters
# -----------------------------------------------------------------------------
def init_params(key):
    keys = iter(jax.random.split(key, 32))

    def w(shape, s=0.05):
        return (s * jax.random.normal(next(keys), shape)).astype(jnp.float32)

    def b(n, s=0.02):
        return (s * jax.random.normal(next(keys), (n,))).astype(jnp.float32)

    def bn(c):
        gamma = (1.0 + 0.1 * jax.random.normal(next(keys), (c,))).astype(jnp.float32)
        beta = (0.05 * jax.random.normal(next(keys), (c,))).astype(jnp.float32)
        mean = (0.01 * jax.random.normal(next(keys), (c,))).astype(jnp.float32)
        var = (1.0 + 0.1 * jax.random.uniform(next(keys), (c,))).astype(jnp.float32)
        return gamma, beta, mean, var

    return {
        "l1_w": w((IN_DIM, H1)), "l1_b": b(H1), "bn1": bn(H1),
        "l2_w": w((H1, H2)), "l2_b": b(H2), "bn2": bn(H2),
        "l3_w": w((H2, POINT_FEAT_DIM)), "l3_b": b(POINT_FEAT_DIM),
    }


# -----------------------------------------------------------------------------
# Main
# -----------------------------------------------------------------------------
if __name__ == "__main__":
    key = jax.random.PRNGKey(0)
    k_pts, k_par = jax.random.split(key)

    B, N = 2, 8
    points = jax.random.normal(k_pts, (B, N, IN_DIM), dtype=jnp.float32)
    params = init_params(k_par)

    out = jax.jit(pointnet_branch_forward)(params, points)
    out = jax.block_until_ready(out)

    assert out.shape == (B, POINT_FEAT_DIM)
    assert bool(jnp.all(jnp.isfinite(out)))

    # bf16 MXU operands (layers 2-3) with f32 accumulation -> small drift vs f32 ref
    ref = pointnet_branch_reference(params, points)
    max_err = float(jnp.max(jnp.abs(out - ref)))
    assert bool(jnp.allclose(out, ref, atol=5e-2, rtol=5e-2)), max_err

    print("KERNEL_OK")
</pallas_src>

<mosaic_0001>
module attributes {stable_mosaic.version = 11 : i64} {
  func.func @_pointnet_fused_kernel(%arg0: i32, %arg1: i32, %arg2: memref<2x8x4xf32, #tpu.memory_space<vmem>>, %arg3: memref<4x64xf32, #tpu.memory_space<vmem>>, %arg4: memref<1x64xf32, #tpu.memory_space<vmem>>, %arg5: memref<64x128xbf16, #tpu.memory_space<vmem>>, %arg6: memref<1x128xf32, #tpu.memory_space<vmem>>, %arg7: memref<128x128xbf16, #tpu.memory_space<vmem>>, %arg8: memref<1x128xf32, #tpu.memory_space<vmem>>, %arg9: memref<2x1x128xf32, #tpu.memory_space<vmem>>) attributes {dimension_semantics = [#tpu.dimension_semantics<parallel>, #tpu.dimension_semantics<arbitrary>], iteration_bounds = array<i64: 1, 1>, scalar_prefetch = 0 : i64, scratch_operands = 0 : i64, tpu.core_type = #tpu.core_type<tc>, window_params = [{transform_indices = @transform_0, window_bounds = array<i64: 2, 8, 4>}, {pipeline_mode = #tpu.pipeline_mode<synchronous>, transform_indices = @transform_1, window_bounds = array<i64: 4, 64>}, {pipeline_mode = #tpu.pipeline_mode<synchronous>, transform_indices = @transform_2, window_bounds = array<i64: 1, 64>}, {pipeline_mode = #tpu.pipeline_mode<synchronous>, transform_indices = @transform_3, window_bounds = array<i64: 64, 128>}, {pipeline_mode = #tpu.pipeline_mode<synchronous>, transform_indices = @transform_4, window_bounds = array<i64: 1, 128>}, {pipeline_mode = #tpu.pipeline_mode<synchronous>, transform_indices = @transform_5, window_bounds = array<i64: 128, 128>}, {pipeline_mode = #tpu.pipeline_mode<synchronous>, transform_indices = @transform_6, window_bounds = array<i64: 1, 128>}, {transform_indices = @transform_7, window_bounds = array<i64: 2, 1, 128>}]} {
    %c0 = arith.constant 0 : index
    %c0_0 = arith.constant 0 : index
    %c0_1 = arith.constant 0 : index
    %0 = vector.load %arg2[%c0, %c0_0, %c0_1] : memref<2x8x4xf32, #tpu.memory_space<vmem>>, vector<2x8x4xf32>
    %1 = vector.shape_cast %0 : vector<2x8x4xf32> to vector<16x4xf32>
    %c0_2 = arith.constant 0 : index
    %c0_3 = arith.constant 0 : index
    %2 = vector.load %arg3[%c0_2, %c0_3] : memref<4x64xf32, #tpu.memory_space<vmem>>, vector<4x64xf32>
    %cst = arith.constant dense<0.000000e+00> : vector<16x64xf32>
    %3 = tpu.matmul %1, %2, %cst {dimension_numbers = #tpu.dot_dimension_numbers<[1], [0], [0], [1], [0, 0, 1, 1], [], []>} : vector<16x4xf32>, vector<4x64xf32>, vector<16x64xf32> -> vector<16x64xf32>
    %c0_4 = arith.constant 0 : index
    %c0_5 = arith.constant 0 : index
    %4 = vector.load %arg4[%c0_4, %c0_5] : memref<1x64xf32, #tpu.memory_space<vmem>>, vector<1x64xf32>
    %5 = vector.broadcast %4 : vector<1x64xf32> to vector<16x64xf32>
    %6 = arith.addf %3, %5 : vector<16x64xf32>
    %cst_6 = arith.constant 0.000000e+00 : f32
    %7 = vector.broadcast %cst_6 : f32 to vector<16x64xf32>
    %8 = arith.maximumf %6, %7 : vector<16x64xf32>
    %9 = arith.truncf %8 : vector<16x64xf32> to vector<16x64xbf16>
    %c0_7 = arith.constant 0 : index
    %c0_8 = arith.constant 0 : index
    %10 = vector.load %arg5[%c0_7, %c0_8] : memref<64x128xbf16, #tpu.memory_space<vmem>>, vector<64x128xbf16>
    %cst_9 = arith.constant dense<0.000000e+00> : vector<16x128xf32>
    %11 = tpu.matmul %9, %10, %cst_9 {dimension_numbers = #tpu.dot_dimension_numbers<[1], [0], [0], [1], [0, 0, 1, 1], [], []>} : vector<16x64xbf16>, vector<64x128xbf16>, vector<16x128xf32> -> vector<16x128xf32>
    %c0_10 = arith.constant 0 : index
    %c0_11 = arith.constant 0 : index
    %12 = vector.load %arg6[%c0_10, %c0_11] : memref<1x128xf32, #tpu.memory_space<vmem>>, vector<1x128xf32>
    %13 = vector.broadcast %12 : vector<1x128xf32> to vector<16x128xf32>
    %14 = arith.addf %11, %13 : vector<16x128xf32>
    %cst_12 = arith.constant 0.000000e+00 : f32
    %15 = vector.broadcast %cst_12 : f32 to vector<16x128xf32>
    %16 = arith.maximumf %14, %15 : vector<16x128xf32>
    %17 = arith.truncf %16 : vector<16x128xf32> to vector<16x128xbf16>
    %c0_13 = arith.constant 0 : index
    %c0_14 = arith.constant 0 : index
    %18 = vector.load %arg7[%c0_13, %c0_14] : memref<128x128xbf16, #tpu.memory_space<vmem>>, vector<128x128xbf16>
    %cst_15 = arith.constant dense<0.000000e+00> : vector<16x128xf32>
    %19 = tpu.matmul %17, %18, %cst_15 {dimension_numbers = #tpu.dot_dimension_numbers<[1], [0], [0], [1], [0, 0, 1, 1], [], []>} : vector<16x128xbf16>, vector<128x128xbf16>, vector<16x128xf32> -> vector<16x128xf32>
    %c0_16 = arith.constant 0 : index
    %c0_17 = arith.constant 0 : index
    %20 = vector.load %arg8[%c0_16, %c0_17] : memref<1x128xf32, #tpu.memory_space<vmem>>, vector<1x128xf32>
    %21 = vector.broadcast %20 : vector<1x128xf32> to vector<16x128xf32>
    %22 = arith.addf %19, %21 : vector<16x128xf32>
    %23 = vector.shape_cast %22 : vector<16x128xf32> to vector<2x8x128xf32>
    %cst_18 = arith.constant dense<0xFF800000> : vector<2x128xf32>
    %24 = vector.multi_reduction <maximumf>, %23, %cst_18 [1] : vector<2x8x128xf32> to vector<2x128xf32>
    %25 = vector.shape_cast %24 : vector<2x128xf32> to vector<2x1x128xf32>
    %c0_19 = arith.constant 0 : index
    %c0_20 = arith.constant 0 : index
    %c0_21 = arith.constant 0 : index
    %26 = vector.load %arg9[%c0_19, %c0_20, %c0_21] : memref<2x1x128xf32, #tpu.memory_space<vmem>>, vector<2x1x128xf32>
    tpu.vector_store %arg9[%c0_19, %c0_20, %c0_21], %25 {strides = array<i32>} : memref<2x1x128xf32, #tpu.memory_space<vmem>>, vector<2x1x128xf32>,
    return
  }
  func.func @transform_0(%arg0: i32, %arg1: i32) -> (i32, i32, i32) {
    %c0_i32 = arith.constant 0 : i32
    %c0_i32_0 = arith.constant 0 : i32
    return %arg0, %arg1, %c0_i32 : i32, i32, i32
  }
  func.func @transform_1(%arg0: i32, %arg1: i32) -> (i32, i32) {
    %c0_i32 = arith.constant 0 : i32
    %c0_i32_0 = arith.constant 0 : i32
    %c0_i32_1 = arith.constant 0 : i32
    return %c0_i32, %c0_i32_0 : i32, i32
  }
  func.func @transform_2(%arg0: i32, %arg1: i32) -> (i32, i32) {
    %c0_i32 = arith.constant 0 : i32
    %c0_i32_0 = arith.constant 0 : i32
    %c0_i32_1 = arith.constant 0 : i32
    return %c0_i32, %c0_i32_0 : i32, i32
  }
  func.func @transform_3(%arg0: i32, %arg1: i32) -> (i32, i32) {
    %c0_i32 = arith.constant 0 : i32
    %c0_i32_0 = arith.constant 0 : i32
    %c0_i32_1 = arith.constant 0 : i32
    return %c0_i32, %c0_i32_0 : i32, i32
  }
  func.func @transform_4(%arg0: i32, %arg1: i32) -> (i32, i32) {
    %c0_i32 = arith.constant 0 : i32
    %c0_i32_0 = arith.constant 0 : i32
    %c0_i32_1 = arith.constant 0 : i32
    return %c0_i32, %c0_i32_0 : i32, i32
  }
  func.func @transform_5(%arg0: i32, %arg1: i32) -> (i32, i32) {
    %c0_i32 = arith.constant 0 : i32
    %c0_i32_0 = arith.constant 0 : i32
    %c0_i32_1 = arith.constant 0 : i32
    return %c0_i32, %c0_i32_0 : i32, i32
  }
  func.func @transform_6(%arg0: i32, %arg1: i32) -> (i32, i32) {
    %c0_i32 = arith.constant 0 : i32
    %c0_i32_0 = arith.constant 0 : i32
    %c0_i32_1 = arith.constant 0 : i32
    return %c0_i32, %c0_i32_0 : i32, i32
  }
  func.func @transform_7(%arg0: i32, %arg1: i32) -> (i32, i32, i32) {
    %c0_i32 = arith.constant 0 : i32
    %c0_i32_0 = arith.constant 0 : i32
    %c0_i32_1 = arith.constant 0 : i32
    return %arg0, %c0_i32, %c0_i32_0 : i32, i32, i32
  }
}

</mosaic_0001>

<llo_original>
// kernel: pointnet_branch_forward.1
$region0: #{pointnet_branch_forward.1}
  #allocation0 [shape = 'u32[]', space=smem, size = 0x4, offset = 0x4, fixed_abs, tag = 'smem constant byte address 0x4 - core index']
  #allocation1 [shape = 'u32[144,128]{1,0:T(1,128)}', space=vmem, size = 0x12000, scoped, tag = 'internal scratch']
  %s0 = inlined_call_operand.vmem [shape: f32[2,8,4], index: 0, kind: input, shape index: {}]
  %s1 = inlined_call_operand.vmem [shape: f32[4,64], index: 1, kind: input, shape index: {}]
  %s2 = inlined_call_operand.vmem [shape: f32[1,64], index: 2, kind: input, shape index: {}]
  %s3 = inlined_call_operand.vmem [shape: bf16[64,128], index: 3, kind: input, shape index: {}]
  %s4 = inlined_call_operand.vmem [shape: f32[1,128], index: 4, kind: input, shape index: {}]
  %s5 = inlined_call_operand.vmem [shape: bf16[128,128], index: 5, kind: input, shape index: {}]
  %s6 = inlined_call_operand.vmem [shape: f32[1,128], index: 6, kind: input, shape index: {}]
  %s7 = inlined_call_operand.hbm [shape: f32[2,1,128], index: 7, kind: output, shape index: {}]
  %s8 = sld [smem:[#allocation0]]
  $region38: #{pointnet_branch_forward.1} parent=0
    _
  %s10 = ssub.s32 1, %s8
  %s11 = scalar_select 0, %s10, %s8
  $region1: #{pointnet_branch_forward.1} parent=0
    #allocation2 [shape = 'u8[1024]{0}', space=vmem, size = 0x400, scoped, tag = 'output window, operand 0, single buffered']
    #allocation3 [shape = 's32[1]{0}', space=sflag, size = 0x4, scoped, tag = 'scoped memory for pointnet_branch_forward.1']
    %12 = vsyncpa [#allocation3], 0
    // Predicated region
    $region2: #{pointnet_branch_forward.1} parent=1 // pred_check
      _
    $region3: #{pointnet_branch_forward.1} parent=1 // pred_check_branch
      %14 = sbr.rel (0) target = $region5
    $region4: #{pointnet_branch_forward.1} parent=1 // pred_region
      _
    $region5: #{pointnet_branch_forward.1} parent=1 // pred_fallthru
      _
    // Predicated region
    $region6: #{pointnet_branch_forward.1} parent=1 // pred_check
      _
    $region7: #{pointnet_branch_forward.1} parent=1 // pred_check_branch
      %16 = sbr.rel (0) target = $region9
    $region8: #{pointnet_branch_forward.1} parent=1 // pred_region
      _
    $region9: #{pointnet_branch_forward.1} parent=1 // pred_fallthru
      _
    // Predicated region
    $region10: #{pointnet_branch_forward.1} parent=1 // pred_check
      _
    $region11: #{pointnet_branch_forward.1} parent=1 // pred_check_branch
      %18 = sbr.rel (0) target = $region13
    $region12: #{pointnet_branch_forward.1} parent=1 // pred_region
      _
    $region13: #{pointnet_branch_forward.1} parent=1 // pred_fallthru
      _
    // Predicated region
    $region14: #{pointnet_branch_forward.1} parent=1 // pred_check
      _
    $region15: #{pointnet_branch_forward.1} parent=1 // pred_check_branch
      %20 = sbr.rel (0) target = $region17
    $region16: #{pointnet_branch_forward.1} parent=1 // pred_region
      _
    $region17: #{pointnet_branch_forward.1} parent=1 // pred_fallthru
      _
    // Predicated region
    $region18: #{pointnet_branch_forward.1} parent=1 // pred_check
      _
    $region19: #{pointnet_branch_forward.1} parent=1 // pred_check_branch
      %22 = sbr.rel (0) target = $region21
    $region20: #{pointnet_branch_forward.1} parent=1 // pred_region
      _
    $region21: #{pointnet_branch_forward.1} parent=1 // pred_fallthru
      _
    // Predicated region
    $region22: #{pointnet_branch_forward.1} parent=1 // pred_check
      _
    $region23: #{pointnet_branch_forward.1} parent=1 // pred_check_branch
      %24 = sbr.rel (0) target = $region25
    $region24: #{pointnet_branch_forward.1} parent=1 // pred_region
      _
    $region25: #{pointnet_branch_forward.1} parent=1 // pred_fallthru
      _
    // Predicated region
    $region26: #{pointnet_branch_forward.1} parent=1 // pred_check
      _
    $region27: #{pointnet_branch_forward.1} parent=1 // pred_check_branch
      %26 = sbr.rel (0) target = $region29
    $region28: #{pointnet_branch_forward.1} parent=1 // pred_region
      _
    $region29: #{pointnet_branch_forward.1} parent=1 // pred_fallthru
      _
    %v28 = vld [vmem:[%s0] sm:$0xff]
    %v29 = vld [vmem:[%s0 + $0x8] sm:$0xff]
    %v30 = vld [vmem:[%s1] sm:$0xf]
    %v31 = vld [vmem:[%s2] sm:$0x1]
    %v33 = vlaneseq
    %v34 = vshrl.u32 %v33, 7
    %v35 = vsub.s32 0, %v34
    %v36 = vrot.slane %v31, %v35
    %vm38 = vcmask 31744
    %v40 = vsel %vm38, %v28, 0
    %v43 = vsel %vm38, %v29, 0
    %vm45 = vcmask 1043456
    %v47 = vsel %vm45, %v30, 0
    %49 = vmatprep.subr.mxu0 0.0
    %50 = vmatpush1.msra.mxu0 0.0
    %51 = vmatprep.subr.mxu0 0.0
    %52 = vmatpush1.msra.mxu0 0.0
    %53 = vmatprep.subr.mxu0 0.0
    %54 = vmatpush1.msra.mxu0 0.0
    %55 = vmatprep.subr.mxu0 0.0
    %56 = vmatpush1.msra.mxu0 0.0
    %57 = vmatprep.subr.mxu0 0.0
    %58 = vmatpush1.msra.mxu0 0.0
    %59 = vmatprep.subr.mxu0 0.0
    %60 = vmatpush1.msra.mxu0 0.0
    %61 = vmatprep.subr.mxu0 0.0
    %62 = vmatpush1.msra.mxu0 0.0
    %63 = vmatprep.subr.mxu0 0.0
    %64 = vmatpush1.msra.mxu0 0.0
    %65 = vmatprep.subr.mxu0 0.0
    %66 = vmatpush1.msra.mxu0 0.0
    %67 = vmatprep.subr.mxu0 0.0
    %68 = vmatpush1.msra.mxu0 0.0
    %69 = vmatprep.subr.mxu0 0.0
    %70 = vmatpush1.msra.mxu0 0.0
    %71 = vmatprep.subr.mxu0 0.0
    %72 = vmatpush1.msra.mxu0 0.0
    %73 = vmatprep.subr.mxu0 0.0
    %74 = vmatpush1.msra.mxu0 0.0
    %75 = vmatprep.subr.mxu0 0.0
    %76 = vmatpush1.msra.mxu0 0.0
    %77 = vmatprep.subr.mxu0 0.0
    %78 = vmatpush1.msra.mxu0 0.0
    %79 = vmatprep.subr.mxu0 0.0
    %80 = vmatpush1.msra.mxu0 %v47
    %81 = vmatprep.subr.mxu0 0.0
    %82 = vmatpush2.msra.mxu0 0.0
    %83 = vmatprep.subr.mxu0 0.0
    %84 = vmatpush2.msra.mxu0 0.0
    %85 = vmatprep.subr.mxu0 0.0
    %86 = vmatpush2.msra.mxu0 0.0
    %87 = vmatprep.subr.mxu0 0.0
    %88 = vmatpush2.msra.mxu0 0.0
    %89 = vmatprep.subr.mxu0 0.0
    %90 = vmatpush2.msra.mxu0 0.0
    %91 = vmatprep.subr.mxu0 0.0
    %92 = vmatpush2.msra.mxu0 0.0
    %93 = vmatprep.subr.mxu0 0.0
    %94 = vmatpush2.msra.mxu0 0.0
    %95 = vmatprep.subr.mxu0 0.0
    %96 = vmatpush2.msra.mxu0 0.0
    %97 = vmatprep.subr.mxu0 0.0
    %98 = vmatpush2.msra.mxu0 0.0
    %99 = vmatprep.subr.mxu0 0.0
    %100 = vmatpush2.msra.mxu0 0.0
    %101 = vmatprep.subr.mxu0 0.0
    %102 = vmatpush2.msra.mxu0 0.0
    %103 = vmatprep.subr.mxu0 0.0
    %104 = vmatpush2.msra.mxu0 0.0
    %105 = vmatprep.subr.mxu0 0.0
    %106 = vmatpush2.msra.mxu0 0.0
    %107 = vmatprep.subr.mxu0 0.0
    %108 = vmatpush2.msra.mxu0 0.0
    %109 = vmatprep.subr.mxu0 0.0
    %110 = vmatpush2.msra.mxu0 0.0
    %111 = vmatprep.subr.mxu0 0.0
    %112 = vmatpush2.msra.mxu0 0.0
    %113 = vmatprep.mubr.f32.mxu0 0.0
    %114 = vmatmul.mubr.f32.gmra.mxu0 %v40
    %v115 = vpop.f32.mrf.mxu0
    %v116 = vadd.f32 %v36, %v115
    %v117 = vpop.f32.mrf.mxu0
    %118 = vmatprep.mubr.f32.mxu0 0.0
    %119 = vmatmul.mubr.f32.gmra.mxu0 %v43
    %v120 = vpop.f32.mrf.mxu0
    %v121 = vadd.f32 %v36, %v120
    %v122 = vpop.f32.mrf.mxu0
    %123 = vdwg.mxu0
    %v124 = vmax.f32 %v116, 0.0
    %v125 = vmax.f32 %v121, 0.0
    %v126 = vpack.c.bf16 %v125, %v124
    %v127 = vld [vmem:[%s3] sm:$0xf]
    %v128 = vld [vmem:[%s3 + $0x4] sm:$0xf]
    %v129 = vld [vmem:[%s3 + $0x8] sm:$0xf]
    %v130 = vld [vmem:[%s3 + $0xc] sm:$0xf]
    %v131 = vld [vmem:[%s3 + $0x10] sm:$0xf]
    %v132 = vld [vmem:[%s3 + $0x14] sm:$0xf]
    %v133 = vld [vmem:[%s3 + $0x18] sm:$0xf]
    %v134 = vld [vmem:[%s3 + $0x1c] sm:$0xf]
    %v135 = vld [vmem:[%s4] sm:$0x1]
    %v137 = vlaneseq
    %v138 = vshrl.u32 %v137, 7
    %v139 = vsub.s32 0, %v138
    %v140 = vrot.slane %v135, %v139
    %v150 = vunpack.c.l.b16 %v127
    %v151 = vunpack.c.l.b16 %v128
    %v152 = vunpack.c.l.b16 %v129
    %v153 = vunpack.c.l.b16 %v130
    %v154 = vunpack.c.l.b16 %v131
    %v155 = vunpack.c.l.b16 %v132
    %v156 = vunpack.c.l.b16 %v133
    %v157 = vunpack.c.l.b16 %v134
    %v158 = vpack.c.b16 %v151, %v150
    %v159 = vpack.c.b16 %v153, %v152
    %v160 = vpack.c.b16 %v155, %v154
    %v161 = vpack.c.b16 %v157, %v156
    %vm166 = vcmask 523264
    %v168 = vsel %vm166, %v126, 0
    %170 = vmatprep.subr.bf16.mxu0 0
    %171 = vmatpush1.bf16.msra.mxu0 0
    %172 = vmatprep.subr.bf16.mxu0 0
    %173 = vmatpush1.bf16.msra.mxu0 0
    %174 = vmatprep.subr.bf16.mxu0 0
    %175 = vmatpush1.bf16.msra.mxu0 0
    %176 = vmatprep.subr.bf16.mxu0 0
    %177 = vmatpush1.bf16.msra.mxu0 0
    %178 = vmatprep.subr.bf16.mxu0 0
    %179 = vmatpush1.bf16.msra.mxu0 %v161
    %180 = vmatprep.subr.bf16.mxu0 0
    %181 = vmatpush1.bf16.msra.mxu0 %v160
    %182 = vmatprep.subr.bf16.mxu0 0
    %183 = vmatpush1.bf16.msra.mxu0 %v159
    %184 = vmatprep.subr.bf16.mxu0 0
    %185 = vmatpush1.bf16.msra.mxu0 %v158
    %186 = vmatprep.subr.bf16.mxu0 0
    %187 = vmatpush2.bf16.msra.mxu0 0
    %188 = vmatprep.subr.bf16.mxu0 0
    %189 = vmatpush2.bf16.msra.mxu0 0
    %190 = vmatprep.subr.bf16.mxu0 0
    %191 = vmatpush2.bf16.msra.mxu0 0
    %192 = vmatprep.subr.bf16.mxu0 0
    %193 = vmatpush2.bf16.msra.mxu0 0
    %194 = vmatprep.subr.bf16.mxu0 0
    %195 = vmatpush2.bf16.msra.mxu0 0
    %196 = vmatprep.subr.bf16.mxu0 0
    %197 = vmatpush2.bf16.msra.mxu0 0
    %198 = vmatprep.subr.bf16.mxu0 0
    %199 = vmatpush2.bf16.msra.mxu0 0
    %200 = vmatprep.subr.bf16.mxu0 0
    %201 = vmatpush2.bf16.msra.mxu0 0
    %202 = vmatprep.mubr.bf16.mxu0 0
    %203 = vmatmul.mubr.bf16.gmra.mxu0 %v168
    %v204 = vpop.f32.mrf.mxu0
    %v205 = vadd.f32 %v140, %v204
    %v206 = vpop.f32.mrf.mxu0
    %v207 = vpop.f32.mrf.mxu0
    %v208 = vadd.f32 %v140, %v207
    %v209 = vpop.f32.mrf.mxu0
    %210 = vdwg.mxu0
    %v211 = vmax.f32 %v205, 0.0
    %v212 = vmax.f32 %v208, 0.0
    %v213 = vpack.c.bf16 %v212, %v211
    %v214 = vld [vmem:[%s5] sm:$0xf]
    %v215 = vld [vmem:[%s5 + $0x4] sm:$0xf]
    %v216 = vld [vmem:[%s5 + $0x8] sm:$0xf]
    %v217 = vld [vmem:[%s5 + $0xc] sm:$0xf]
    %v218 = vld [vmem:[%s5 + $0x10] sm:$0xf]
    %v219 = vld [vmem:[%s5 + $0x14] sm:$0xf]
    %v220 = vld [vmem:[%s5 + $0x18] sm:$0xf]
    %v221 = vld [vmem:[%s5 + $0x1c] sm:$0xf]
    %v222 = vld [vmem:[%s5 + $0x20] sm:$0xf]
    %v223 = vld [vmem:[%s5 + $0x24] sm:$0xf]
    %v224 = vld [vmem:[%s5 + $0x28] sm:$0xf]
    %v225 = vld [vmem:[%s5 + $0x2c] sm:$0xf]
    %v226 = vld [vmem:[%s5 + $0x30] sm:$0xf]
    %v227 = vld [vmem:[%s5 + $0x34] sm:$0xf]
    %v228 = vld [vmem:[%s5 + $0x38] sm:$0xf]
    %v229 = vld [vmem:[%s5 + $0x3c] sm:$0xf]
    %v230 = vld [vmem:[%s6] sm:$0x1]
    %v232 = vlaneseq
    %v233 = vshrl.u32 %v232, 7
    %v234 = vsub.s32 0, %v233
    %v235 = vrot.slane %v230, %v234
    %v253 = vunpack.c.l.b16 %v214
    %v254 = vunpack.c.l.b16 %v215
    %v255 = vunpack.c.l.b16 %v216
    %v256 = vunpack.c.l.b16 %v217
    %v257 = vunpack.c.l.b16 %v218
    %v258 = vunpack.c.l.b16 %v219
    %v259 = vunpack.c.l.b16 %v220
    %v260 = vunpack.c.l.b16 %v221
    %v261 = vunpack.c.l.b16 %v222
    %v262 = vunpack.c.l.b16 %v223
    %v263 = vunpack.c.l.b16 %v224
    %v264 = vunpack.c.l.b16 %v225
    %v265 = vunpack.c.l.b16 %v226
    %v266 = vunpack.c.l.b16 %v227
    %v267 = vunpack.c.l.b16 %v228
    %v268 = vunpack.c.l.b16 %v229
    %v269 = vpack.c.b16 %v254, %v253
    %v270 = vpack.c.b16 %v256, %v255
    %v271 = vpack.c.b16 %v258, %v257
    %v272 = vpack.c.b16 %v260, %v259
    %v273 = vpack.c.b16 %v262, %v261
    %v274 = vpack.c.b16 %v264, %v263
    %v275 = vpack.c.b16 %v266, %v265
    %v276 = vpack.c.b16 %v268, %v267
    %285 = vmatprep.subr.bf16.mxu0 0
    %286 = vmatpush1.bf16.msra.mxu0 %v276
    %287 = vmatprep.subr.bf16.mxu0 0
    %288 = vmatpush1.bf16.msra.mxu0 %v275
    %289 = vmatprep.subr.bf16.mxu0 0
    %290 = vmatpush1.bf16.msra.mxu0 %v274
    %291 = vmatprep.subr.bf16.mxu0 0
    %292 = vmatpush1.bf16.msra.mxu0 %v273
    %293 = vmatprep.subr.bf16.mxu0 0
    %294 = vmatpush1.bf16.msra.mxu0 %v272
    %295 = vmatprep.subr.bf16.mxu0 0
    %296 = vmatpush1.bf16.msra.mxu0 %v271
    %297 = vmatprep.subr.bf16.mxu0 0
    %298 = vmatpush1.bf16.msra.mxu0 %v270
    %299 = vmatprep.subr.bf16.mxu0 0
    %300 = vmatpush1.bf16.msra.mxu0 %v269
    %301 = vmatprep.subr.bf16.mxu0 0
    %302 = vmatpush2.bf16.msra.mxu0 0
    %303 = vmatprep.subr.bf16.mxu0 0
    %304 = vmatpush2.bf16.msra.mxu0 0
    %305 = vmatprep.subr.bf16.mxu0 0
    %306 = vmatpush2.bf16.msra.mxu0 0
    %307 = vmatprep.subr.bf16.mxu0 0
    %308 = vmatpush2.bf16.msra.mxu0 0
    %309 = vmatprep.subr.bf16.mxu0 0
    %310 = vmatpush2.bf16.msra.mxu0 0
    %311 = vmatprep.subr.bf16.mxu0 0
    %312 = vmatpush2.bf16.msra.mxu0 0
    %313 = vmatprep.subr.bf16.mxu0 0
    %314 = vmatpush2.bf16.msra.mxu0 0
    %315 = vmatprep.subr.bf16.mxu0 0
    %316 = vmatpush2.bf16.msra.mxu0 0
    %317 = vmatprep.mubr.bf16.mxu0 0
    %318 = vmatmul.mubr.bf16.gmra.mxu0 %v213
    %v319 = vpop.f32.mrf.mxu0
    %v320 = vadd.f32 %v235, %v319
    %v321 = vpop.f32.mrf.mxu0
    %v322 = vpop.f32.mrf.mxu0
    %v323 = vadd.f32 %v235, %v322
    %v324 = vpop.f32.mrf.mxu0
    %325 = vdwg.mxu0
    %v326 = vrot.slane %v320, 4
    %v327 = vmax.f32 %v320, %v326
    %v328 = vrot.slane %v327, 2
    %v329 = vmax.f32 %v327, %v328
    %v330 = vrot.slane %v329, 1
    %v331 = vmax.f32 %v329, %v330
    %v332 = vrot.slane %v323, 4
    %v333 = vmax.f32 %v323, %v332
    %v334 = vrot.slane %v333, 2
    %v335 = vmax.f32 %v333, %v334
    %v336 = vrot.slane %v335, 1
    %v337 = vmax.f32 %v335, %v336
    %338 = vst [vmem:[#allocation2] sm:$0x1] %v331
    %339 = vst [vmem:[#allocation2 + $0x1] sm:$0x1] %v337
    // Predicated region
    $region30: #{pointnet_branch_forward.1} parent=1 // pred_check
      _
    $region31: #{pointnet_branch_forward.1} parent=1 // pred_check_branch
      %341 = sbr.rel (0) target = $region33
    $region32: #{pointnet_branch_forward.1} parent=1 // pred_region
      %s343 = ssub.s32 32, 32
      %344 = vsyncadd [#allocation3], %s343
      %s345 = sshll.u32 [#allocation2], 4
      %s346 = int_to_ptr.vmem [resolvable:$true] %s345
      %351 = dma.vmem_to_hbm [thread:$0]  %s346, 32, %s7, [#allocation3], 16, 16, 1
    $region33: #{pointnet_branch_forward.1} parent=1 // pred_fallthru
      _
    // Predicated region
    $region34: #{pointnet_branch_forward.1} parent=1 // pred_check
      _
    $region35: #{pointnet_branch_forward.1} parent=1 // pred_check_branch
      %353 = sbr.rel (0) target = $region37
    $region36: #{pointnet_branch_forward.1} parent=1 // pred_region
      %354 = dma.done [#allocation3], 32
    $region37: #{pointnet_branch_forward.1} parent=1 // pred_fallthru
      _
    %355 = vsyncpa [#allocation3], 1

</llo_original>
